<compile_context>
chip_gen: v7x
topology: tpu7x:2x2x1
jax: 0.10.0
libtpu: 0.0.40
codegen_flags: <defaults>
</compile_context>

<pallas_src>
from functools import partial

import jax
import jax.numpy as jnp
from jax.experimental import pallas as pl
from jax.experimental.pallas import tpu as pltpu  # noqa: F401  (TPU backend)


# ---------------------------------------------------------------------------
# Glue that mirrors the PyTorch wrapper (pure Python / JAX reshapes).
# ---------------------------------------------------------------------------

GRAPH_CAPTUM_FEAT = ["x", "molecule_features", "edge_attr"]


def reshape_with_extra_dim(t, n_steps):
    assert t.shape[0] % n_steps == 0, (
        f"First dimension size should be divisible by {n_steps}"
    )
    new_shape = (n_steps, t.shape[0] // n_steps) + tuple(t.shape[1:])
    return t.reshape(new_shape)


def tensor_to_dict(inputs, n_steps):
    """Mirror of ModelWrapper.tensor_to_dict / process_graph_feature.

    `inputs` is a flat tuple whose last element is the metadata dict
    `original_feature_key`.  Graph tensors with a leading dim divisible by
    n_steps are reshaped to [n_steps, per_graph, ...]; batching the n_steps
    graphs is represented by keeping that leading batch axis.
    """
    inputs = list(inputs)
    original_feature_key = inputs.pop(-1)

    data = {}
    id_input = 0
    for key_name, _type in original_feature_key["inputs"]:
        if _type == "graph":
            graph_attr = original_feature_key["graph_attr"]
            captum_graph_attr = []
            n_graph_feat = len(graph_attr)
            for graph_key in graph_attr:
                if graph_key in GRAPH_CAPTUM_FEAT:
                    captum_graph_attr.append(inputs[id_input])
                    n_graph_feat -= 1
                    id_input += 1
            data_graph = list(inputs[-n_graph_feat:]) if n_graph_feat > 0 else []
            data_graph = data_graph + captum_graph_attr
            if data_graph[0].shape[0] % n_steps == 0:
                data_graph = [
                    reshape_with_extra_dim(t, n_steps) for t in data_graph
                ]
            # TODO(synk): TorchGeometricData / Batch.from_data_list have no
            # Pallas equivalent; batching is represented by the leading
            # n_steps axis on each graph tensor.
            data[key_name] = dict(zip(graph_attr, data_graph))
        else:
            data[key_name] = inputs[id_input]
            id_input += 1
    return data


# ---------------------------------------------------------------------------
# Pallas kernel: surrogate AbstractNetwork forward, single invocation over all
# n_steps interpolation graphs (flattened-leading-dim matmuls).
# ---------------------------------------------------------------------------

def _model_kernel(
    n_steps, nodes, edges,                     # static shape params
    x_ref, e_ref, m_ref,                       # batched graph inputs
    wn_ref, bn_ref, we_ref, be_ref,            # node / edge projections
    wm_ref, wo_ref, bo_ref,                    # molecule proj + output head
    out_ref,
):
    f_node = x_ref.shape[-1]
    f_edge = e_ref.shape[-1]

    # Node branch: ONE (n_steps*nodes, F_node) @ (F_node, H) matmul,
    # then ReLU and per-step sum-pool (cross-sublane reduce -> XLU).
    x2 = x_ref[...].reshape(n_steps * nodes, f_node)
    h = jnp.dot(x2, wn_ref[...], preferred_element_type=jnp.float32) + bn_ref[...]
    h = jnp.maximum(h, 0.0)
    node_sum = jnp.sum(h.reshape(n_steps, nodes, -1), axis=1)       # [n_steps, H]

    # Edge branch: ONE (n_steps*edges, F_edge) @ (F_edge, H) matmul.
    e2 = e_ref[...].reshape(n_steps * edges, f_edge)
    he = jnp.dot(e2, we_ref[...], preferred_element_type=jnp.float32) + be_ref[...]
    he = jnp.maximum(he, 0.0)
    edge_sum = jnp.sum(he.reshape(n_steps, edges, -1), axis=1)      # [n_steps, H]

    # Molecule-feature projection (single (n_steps, F_mol) @ (F_mol, H)).
    mh = jnp.dot(m_ref[...], wm_ref[...], preferred_element_type=jnp.float32)

    # Fold the 1/nodes, 1/edges mean scales into cheap scalar multiplies on the
    # already-pooled [n_steps, H] tensors (no per-element divide on the full
    # activations).
    feat = node_sum * (1.0 / nodes) + edge_sum * (1.0 / edges) + mh  # [n_steps, H]

    # Batched output head: one (n_steps, H) @ (H, OUT) matmul, one store.
    out = jnp.dot(feat, wo_ref[...], preferred_element_type=jnp.float32) + bo_ref[...]
    out_ref[...] = out.astype(out_ref.dtype)


def surrogate_model_forward(graph, params):
    """Runs the Pallas kernel once over the batched (n_steps) graphs."""
    x = graph["x"]                   # [n_steps, nodes, F_node]
    e = graph["edge_attr"]           # [n_steps, edges, F_edge]
    m = graph["molecule_features"]   # [n_steps, F_mol]

    n_steps, nodes, f_node = x.shape
    _, edges, f_edge = e.shape
    f_mol = m.shape[-1]
    hidden = params["w_node"].shape[1]
    out_dim = params["w_out"].shape[1]

    # Advisory cost hint so XLA schedules this tiny kernel well relative to the
    # surrounding integrated-gradient ops.
    flops = 2 * n_steps * (nodes * f_node + edges * f_edge + f_mol + out_dim) * hidden
    bytes_accessed = 4 * (
        x.size + e.size + m.size
        + sum(int(p.size) for p in params.values())
        + n_steps * out_dim
    )
    cost = pl.CostEstimate(
        flops=flops, transcendentals=0, bytes_accessed=bytes_accessed
    )

    # TODO(synk): if the real AbstractNetwork has HIDDEN/OUT >> these toy sizes,
    # pad HIDDEN/OUT to multiples of 128 and (on v6e/v7x) cast inputs/weights to
    # bf16 with f32 accumulation; also re-derive block sizes for v7x's 64 MiB VMEM.
    out = pl.pallas_call(
        partial(_model_kernel, n_steps, nodes, edges),
        out_shape=jax.ShapeDtypeStruct((n_steps, out_dim), jnp.float32),
        cost_estimate=cost,
    )(
        x, e, m,
        params["w_node"], params["b_node"],
        params["w_edge"], params["b_edge"],
        params["w_mol"], params["w_out"], params["b_out"],
    )
    return out


# ---------------------------------------------------------------------------
# ModelWrapper equivalent.
# ---------------------------------------------------------------------------

def model_wrapper_forward(args, params, n_steps):
    data = tensor_to_dict(args, n_steps)
    graph_dict = data["graph"]
    graph = {
        "x": graph_dict["x"],
        "edge_attr": graph_dict["edge_attr"],
        "molecule_features": data["molecule_features"],
    }
    return surrogate_model_forward(graph, params)


def _reference_forward(graph, params):
    x, e, m = graph["x"], graph["edge_attr"], graph["molecule_features"]
    h = jnp.maximum(jnp.einsum("bnf,fh->bnh", x, params["w_node"]) + params["b_node"], 0.0)
    he = jnp.maximum(jnp.einsum("bef,fh->beh", e, params["w_edge"]) + params["b_edge"], 0.0)
    feat = h.mean(axis=1) + he.mean(axis=1) + m @ params["w_mol"]
    return feat @ params["w_out"] + params["b_out"]


if __name__ == "__main__":
    # Small, deterministic shapes.
    N_STEPS = 4          # integrated-gradient interpolation steps
    NODES_PER_GRAPH = 8
    EDGES_PER_GRAPH = 16
    F_NODE, F_EDGE, F_MOL = 16, 8, 8
    HIDDEN, OUT_DIM = 32, 8

    key = jax.random.PRNGKey(0)
    ks = jax.random.split(key, 10)

    # Captum-style flat inputs (leading dim = n_steps * per_graph for graph tensors).
    x = jax.random.normal(ks[0], (N_STEPS * NODES_PER_GRAPH, F_NODE), jnp.float32)
    mol = jax.random.normal(ks[1], (N_STEPS, F_MOL), jnp.float32)
    edge_attr = jax.random.normal(ks[2], (N_STEPS * EDGES_PER_GRAPH, F_EDGE), jnp.float32)

    # Deterministic synthetic model parameters.
    params = {
        "w_node": jax.random.normal(ks[3], (F_NODE, HIDDEN), jnp.float32) * 0.1,
        "b_node": jax.random.normal(ks[4], (1, HIDDEN), jnp.float32) * 0.1,
        "w_edge": jax.random.normal(ks[5], (F_EDGE, HIDDEN), jnp.float32) * 0.1,
        "b_edge": jax.random.normal(ks[6], (1, HIDDEN), jnp.float32) * 0.1,
        "w_mol": jax.random.normal(ks[7], (F_MOL, HIDDEN), jnp.float32) * 0.1,
        "w_out": jax.random.normal(ks[8], (HIDDEN, OUT_DIM), jnp.float32) * 0.1,
        "b_out": jax.random.normal(ks[9], (1, OUT_DIM), jnp.float32) * 0.1,
    }

    # Metadata dict matching the wrapper's `original_feature_key` convention.
    original_feature_key = {
        "inputs": [("graph", "graph"), ("molecule_features", "tensor")],
        "graph_attr": ["x", "edge_attr"],
    }

    args = (x, edge_attr, mol, original_feature_key)

    out = model_wrapper_forward(args, params, N_STEPS)
    out = jax.block_until_ready(out)

    # Sanity check against the pure-JAX reference of the surrogate model.
    graph = {
        "x": x.reshape(N_STEPS, NODES_PER_GRAPH, F_NODE),
        "edge_attr": edge_attr.reshape(N_STEPS, EDGES_PER_GRAPH, F_EDGE),
        "molecule_features": mol,
    }
    ref = _reference_forward(graph, params)
    assert out.shape == (N_STEPS, OUT_DIM)
    assert jnp.allclose(out, ref, atol=1e-4, rtol=1e-4)

    print("KERNEL_OK")
</pallas_src>

<mosaic_0001>
module attributes {stable_mosaic.version = 11 : i64} {
  func.func @_model_kernel(%arg0: memref<4x8x16xf32, #tpu.memory_space<vmem>>, %arg1: memref<4x16x8xf32, #tpu.memory_space<vmem>>, %arg2: memref<4x8xf32, #tpu.memory_space<vmem>>, %arg3: memref<16x32xf32, #tpu.memory_space<vmem>>, %arg4: memref<1x32xf32, #tpu.memory_space<vmem>>, %arg5: memref<8x32xf32, #tpu.memory_space<vmem>>, %arg6: memref<1x32xf32, #tpu.memory_space<vmem>>, %arg7: memref<8x32xf32, #tpu.memory_space<vmem>>, %arg8: memref<32x8xf32, #tpu.memory_space<vmem>>, %arg9: memref<1x8xf32, #tpu.memory_space<vmem>>, %arg10: memref<4x8xf32, #tpu.memory_space<vmem>>) attributes {dimension_semantics = [], scalar_prefetch = 0 : i64, scratch_operands = 0 : i64, tpu.core_type = #tpu.core_type<tc>} {
    %c0 = arith.constant 0 : index
    %c0_0 = arith.constant 0 : index
    %c0_1 = arith.constant 0 : index
    %0 = vector.load %arg0[%c0, %c0_0, %c0_1] : memref<4x8x16xf32, #tpu.memory_space<vmem>>, vector<4x8x16xf32>
    %1 = vector.shape_cast %0 : vector<4x8x16xf32> to vector<32x16xf32>
    %c0_2 = arith.constant 0 : index
    %c0_3 = arith.constant 0 : index
    %2 = vector.load %arg3[%c0_2, %c0_3] : memref<16x32xf32, #tpu.memory_space<vmem>>, vector<16x32xf32>
    %cst = arith.constant dense<0.000000e+00> : vector<32x32xf32>
    %3 = tpu.matmul %1, %2, %cst {dimension_numbers = #tpu.dot_dimension_numbers<[1], [0], [0], [1], [0, 0, 1, 1], [], []>} : vector<32x16xf32>, vector<16x32xf32>, vector<32x32xf32> -> vector<32x32xf32>
    %c0_4 = arith.constant 0 : index
    %c0_5 = arith.constant 0 : index
    %4 = vector.load %arg4[%c0_4, %c0_5] : memref<1x32xf32, #tpu.memory_space<vmem>>, vector<1x32xf32>
    %5 = vector.broadcast %4 : vector<1x32xf32> to vector<32x32xf32>
    %6 = arith.addf %3, %5 : vector<32x32xf32>
    %cst_6 = arith.constant 0.000000e+00 : f32
    %7 = vector.broadcast %cst_6 : f32 to vector<32x32xf32>
    %8 = arith.maximumf %6, %7 : vector<32x32xf32>
    %9 = vector.shape_cast %8 : vector<32x32xf32> to vector<4x8x32xf32>
    %cst_7 = arith.constant dense<0.000000e+00> : vector<4x32xf32>
    %10 = vector.multi_reduction <add>, %9, %cst_7 [1] : vector<4x8x32xf32> to vector<4x32xf32>
    %c0_8 = arith.constant 0 : index
    %c0_9 = arith.constant 0 : index
    %c0_10 = arith.constant 0 : index
    %11 = vector.load %arg1[%c0_8, %c0_9, %c0_10] : memref<4x16x8xf32, #tpu.memory_space<vmem>>, vector<4x16x8xf32>
    %12 = vector.shape_cast %11 : vector<4x16x8xf32> to vector<64x8xf32>
    %c0_11 = arith.constant 0 : index
    %c0_12 = arith.constant 0 : index
    %13 = vector.load %arg5[%c0_11, %c0_12] : memref<8x32xf32, #tpu.memory_space<vmem>>, vector<8x32xf32>
    %cst_13 = arith.constant dense<0.000000e+00> : vector<64x32xf32>
    %14 = tpu.matmul %12, %13, %cst_13 {dimension_numbers = #tpu.dot_dimension_numbers<[1], [0], [0], [1], [0, 0, 1, 1], [], []>} : vector<64x8xf32>, vector<8x32xf32>, vector<64x32xf32> -> vector<64x32xf32>
    %c0_14 = arith.constant 0 : index
    %c0_15 = arith.constant 0 : index
    %15 = vector.load %arg6[%c0_14, %c0_15] : memref<1x32xf32, #tpu.memory_space<vmem>>, vector<1x32xf32>
    %16 = vector.broadcast %15 : vector<1x32xf32> to vector<64x32xf32>
    %17 = arith.addf %14, %16 : vector<64x32xf32>
    %cst_16 = arith.constant 0.000000e+00 : f32
    %18 = vector.broadcast %cst_16 : f32 to vector<64x32xf32>
    %19 = arith.maximumf %17, %18 : vector<64x32xf32>
    %20 = vector.shape_cast %19 : vector<64x32xf32> to vector<4x16x32xf32>
    %cst_17 = arith.constant dense<0.000000e+00> : vector<4x32xf32>
    %21 = vector.multi_reduction <add>, %20, %cst_17 [1] : vector<4x16x32xf32> to vector<4x32xf32>
    %c0_18 = arith.constant 0 : index
    %c0_19 = arith.constant 0 : index
    %22 = vector.load %arg2[%c0_18, %c0_19] : memref<4x8xf32, #tpu.memory_space<vmem>>, vector<4x8xf32>
    %c0_20 = arith.constant 0 : index
    %c0_21 = arith.constant 0 : index
    %23 = vector.load %arg7[%c0_20, %c0_21] : memref<8x32xf32, #tpu.memory_space<vmem>>, vector<8x32xf32>
    %cst_22 = arith.constant dense<0.000000e+00> : vector<4x32xf32>
    %24 = tpu.matmul %22, %23, %cst_22 {dimension_numbers = #tpu.dot_dimension_numbers<[1], [0], [0], [1], [0, 0, 1, 1], [], []>} : vector<4x8xf32>, vector<8x32xf32>, vector<4x32xf32> -> vector<4x32xf32>
    %cst_23 = arith.constant 1.250000e-01 : f32
    %25 = vector.broadcast %cst_23 : f32 to vector<4x32xf32>
    %26 = arith.mulf %10, %25 : vector<4x32xf32>
    %cst_24 = arith.constant 6.250000e-02 : f32
    %27 = vector.broadcast %cst_24 : f32 to vector<4x32xf32>
    %28 = arith.mulf %21, %27 : vector<4x32xf32>
    %29 = arith.addf %26, %28 : vector<4x32xf32>
    %30 = arith.addf %29, %24 : vector<4x32xf32>
    %c0_25 = arith.constant 0 : index
    %c0_26 = arith.constant 0 : index
    %31 = vector.load %arg8[%c0_25, %c0_26] : memref<32x8xf32, #tpu.memory_space<vmem>>, vector<32x8xf32>
    %cst_27 = arith.constant dense<0.000000e+00> : vector<4x8xf32>
    %32 = tpu.matmul %30, %31, %cst_27 {dimension_numbers = #tpu.dot_dimension_numbers<[1], [0], [0], [1], [0, 0, 1, 1], [], []>} : vector<4x32xf32>, vector<32x8xf32>, vector<4x8xf32> -> vector<4x8xf32>
    %c0_28 = arith.constant 0 : index
    %c0_29 = arith.constant 0 : index
    %33 = vector.load %arg9[%c0_28, %c0_29] : memref<1x8xf32, #tpu.memory_space<vmem>>, vector<1x8xf32>
    %34 = vector.broadcast %33 : vector<1x8xf32> to vector<4x8xf32>
    %35 = arith.addf %32, %34 : vector<4x8xf32>
    %c0_30 = arith.constant 0 : index
    %c0_31 = arith.constant 0 : index
    %36 = vector.load %arg10[%c0_30, %c0_31] : memref<4x8xf32, #tpu.memory_space<vmem>>, vector<4x8xf32>
    tpu.vector_store %arg10[%c0_30, %c0_31], %35 {strides = array<i32>} : memref<4x8xf32, #tpu.memory_space<vmem>>, vector<4x8xf32>,
    return
  }
}

</mosaic_0001>

<llo_original>
// kernel: tpu_custom_call.1
$region0: #{tpu_custom_call.1}
  #allocation0 [shape = 'u32[]', space=smem, size = 0x4, offset = 0x4, fixed_abs, tag = 'smem constant byte address 0x4 - core index']
  #allocation1 [shape = 'u32[144,128]{1,0:T(1,128)}', space=vmem, size = 0x12000, scoped, tag = 'internal scratch']
  %s0 = inlined_call_operand.vmem [shape: f32[4,8,16], index: 0, kind: input, shape index: {}]
  %s1 = inlined_call_operand.vmem [shape: f32[4,16,8], index: 1, kind: input, shape index: {}]
  %s2 = inlined_call_operand.vmem [shape: f32[4,8], index: 2, kind: input, shape index: {}]
  %s3 = inlined_call_operand.vmem [shape: f32[16,32], index: 3, kind: input, shape index: {}]
  %s4 = inlined_call_operand.vmem [shape: f32[1,32], index: 4, kind: input, shape index: {}]
  %s5 = inlined_call_operand.vmem [shape: f32[8,32], index: 5, kind: input, shape index: {}]
  %s6 = inlined_call_operand.vmem [shape: f32[1,32], index: 6, kind: input, shape index: {}]
  %s7 = inlined_call_operand.vmem [shape: f32[8,32], index: 7, kind: input, shape index: {}]
  %s8 = inlined_call_operand.vmem [shape: f32[32,8], index: 8, kind: input, shape index: {}]
  %s9 = inlined_call_operand.vmem [shape: f32[1,8], index: 9, kind: input, shape index: {}]
  %s10 = inlined_call_operand.hbm [shape: f32[4,8], index: 10, kind: output, shape index: {}]
  %s11 = sld [smem:[#allocation0]]
  $region50: #{tpu_custom_call.1} parent=0
    _
  %s13 = ssub.s32 1, %s11
  %s14 = scalar_select 0, %s13, %s11
  $region1: #{tpu_custom_call.1} parent=0
    #allocation2 [shape = 'u8[2048]{0}', space=vmem, size = 0x800, scoped, tag = 'output window, operand 0, single buffered']
    #allocation3 [shape = 's32[1]{0}', space=sflag, size = 0x4, scoped, tag = 'scoped memory for tpu_custom_call.1']
    %15 = vsyncpa [#allocation3], 0
    // Predicated region
    $region2: #{tpu_custom_call.1} parent=1 // pred_check
      _
    $region3: #{tpu_custom_call.1} parent=1 // pred_check_branch
      %17 = sbr.rel (0) target = $region5
    $region4: #{tpu_custom_call.1} parent=1 // pred_region
      _
    $region5: #{tpu_custom_call.1} parent=1 // pred_fallthru
      _
    // Predicated region
    $region6: #{tpu_custom_call.1} parent=1 // pred_check
      _
    $region7: #{tpu_custom_call.1} parent=1 // pred_check_branch
      %19 = sbr.rel (0) target = $region9
    $region8: #{tpu_custom_call.1} parent=1 // pred_region
      _
    $region9: #{tpu_custom_call.1} parent=1 // pred_fallthru
      _
    // Predicated region
    $region10: #{tpu_custom_call.1} parent=1 // pred_check
      _
    $region11: #{tpu_custom_call.1} parent=1 // pred_check_branch
      %21 = sbr.rel (0) target = $region13
    $region12: #{tpu_custom_call.1} parent=1 // pred_region
      _
    $region13: #{tpu_custom_call.1} parent=1 // pred_fallthru
      _
    // Predicated region
    $region14: #{tpu_custom_call.1} parent=1 // pred_check
      _
    $region15: #{tpu_custom_call.1} parent=1 // pred_check_branch
      %23 = sbr.rel (0) target = $region17
    $region16: #{tpu_custom_call.1} parent=1 // pred_region
      _
    $region17: #{tpu_custom_call.1} parent=1 // pred_fallthru
      _
    // Predicated region
    $region18: #{tpu_custom_call.1} parent=1 // pred_check
      _
    $region19: #{tpu_custom_call.1} parent=1 // pred_check_branch
      %25 = sbr.rel (0) target = $region21
    $region20: #{tpu_custom_call.1} parent=1 // pred_region
      _
    $region21: #{tpu_custom_call.1} parent=1 // pred_fallthru
      _
    // Predicated region
    $region22: #{tpu_custom_call.1} parent=1 // pred_check
      _
    $region23: #{tpu_custom_call.1} parent=1 // pred_check_branch
      %27 = sbr.rel (0) target = $region25
    $region24: #{tpu_custom_call.1} parent=1 // pred_region
      _
    $region25: #{tpu_custom_call.1} parent=1 // pred_fallthru
      _
    // Predicated region
    $region26: #{tpu_custom_call.1} parent=1 // pred_check
      _
    $region27: #{tpu_custom_call.1} parent=1 // pred_check_branch
      %29 = sbr.rel (0) target = $region29
    $region28: #{tpu_custom_call.1} parent=1 // pred_region
      _
    $region29: #{tpu_custom_call.1} parent=1 // pred_fallthru
      _
    // Predicated region
    $region30: #{tpu_custom_call.1} parent=1 // pred_check
      _
    $region31: #{tpu_custom_call.1} parent=1 // pred_check_branch
      %31 = sbr.rel (0) target = $region33
    $region32: #{tpu_custom_call.1} parent=1 // pred_region
      _
    $region33: #{tpu_custom_call.1} parent=1 // pred_fallthru
      _
    // Predicated region
    $region34: #{tpu_custom_call.1} parent=1 // pred_check
      _
    $region35: #{tpu_custom_call.1} parent=1 // pred_check_branch
      %33 = sbr.rel (0) target = $region37
    $region36: #{tpu_custom_call.1} parent=1 // pred_region
      _
    $region37: #{tpu_custom_call.1} parent=1 // pred_fallthru
      _
    // Predicated region
    $region38: #{tpu_custom_call.1} parent=1 // pred_check
      _
    $region39: #{tpu_custom_call.1} parent=1 // pred_check_branch
      %35 = sbr.rel (0) target = $region41
    $region40: #{tpu_custom_call.1} parent=1 // pred_region
      _
    $region41: #{tpu_custom_call.1} parent=1 // pred_fallthru
      _
    %v36 = vld [vmem:[%s0] sm:$0xff]
    %v37 = vld [vmem:[%s0 + $0x8] sm:$0xff]
    %v38 = vld [vmem:[%s0 + $0x10] sm:$0xff]
    %v39 = vld [vmem:[%s0 + $0x18] sm:$0xff]
    %v40 = vld [vmem:[%s3] sm:$0xff]
    %v41 = vld [vmem:[%s3 + $0x8] sm:$0xff]
    %v42 = vld [vmem:[%s4] sm:$0x1]
    %v44 = vlaneseq
    %v45 = vshrl.u32 %v44, 7
    %v46 = vsub.s32 0, %v45
    %v47 = vrot.slane %v42, %v46
    %vm49 = vcmask 130048
    %v51 = vsel %vm49, %v36, 0
    %v54 = vsel %vm49, %v37, 0
    %v57 = vsel %vm49, %v38, 0
    %v60 = vsel %vm49, %v39, 0
    %62 = vmatprep.subr.mxu0 0.0
    %63 = vmatpush1.msra.mxu0 %v40
    %64 = vmatprep.subr.mxu0 0.0
    %65 = vmatpush1.msra.mxu0 %v41
    %66 = vmatprep.subr.mxu0 0.0
    %67 = vmatpush1.msra.mxu0 0.0
    %68 = vmatprep.subr.mxu0 0.0
    %69 = vmatpush1.msra.mxu0 0.0
    %70 = vmatprep.subr.mxu0 0.0
    %71 = vmatpush1.msra.mxu0 0.0
    %72 = vmatprep.subr.mxu0 0.0
    %73 = vmatpush1.msra.mxu0 0.0
    %74 = vmatprep.subr.mxu0 0.0
    %75 = vmatpush1.msra.mxu0 0.0
    %76 = vmatprep.subr.mxu0 0.0
    %77 = vmatpush1.msra.mxu0 0.0
    %78 = vmatprep.subr.mxu0 0.0
    %79 = vmatpush1.msra.mxu0 0.0
    %80 = vmatprep.subr.mxu0 0.0
    %81 = vmatpush1.msra.mxu0 0.0
    %82 = vmatprep.subr.mxu0 0.0
    %83 = vmatpush1.msra.mxu0 0.0
    %84 = vmatprep.subr.mxu0 0.0
    %85 = vmatpush1.msra.mxu0 0.0
    %86 = vmatprep.subr.mxu0 0.0
    %87 = vmatpush1.msra.mxu0 0.0
    %88 = vmatprep.subr.mxu0 0.0
    %89 = vmatpush1.msra.mxu0 0.0
    %90 = vmatprep.subr.mxu0 0.0
    %91 = vmatpush1.msra.mxu0 0.0
    %92 = vmatprep.subr.mxu0 0.0
    %93 = vmatpush1.msra.mxu0 0.0
    %94 = vmatprep.subr.mxu0 0.0
    %95 = vmatpush1.msra.mxu0 0.0
    %96 = vmatprep.subr.mxu0 0.0
    %97 = vmatpush1.msra.mxu0 0.0
    %98 = vmatprep.subr.mxu0 0.0
    %99 = vmatpush1.msra.mxu0 0.0
    %100 = vmatprep.subr.mxu0 0.0
    %101 = vmatpush1.msra.mxu0 0.0
    %102 = vmatprep.subr.mxu0 0.0
    %103 = vmatpush1.msra.mxu0 0.0
    %104 = vmatprep.subr.mxu0 0.0
    %105 = vmatpush1.msra.mxu0 0.0
    %106 = vmatprep.subr.mxu0 0.0
    %107 = vmatpush1.msra.mxu0 0.0
    %108 = vmatprep.subr.mxu0 0.0
    %109 = vmatpush1.msra.mxu0 0.0
    %110 = vmatprep.subr.mxu0 0.0
    %111 = vmatpush1.msra.mxu0 0.0
    %112 = vmatprep.subr.mxu0 0.0
    %113 = vmatpush1.msra.mxu0 0.0
    %114 = vmatprep.subr.mxu0 0.0
    %115 = vmatpush1.msra.mxu0 0.0
    %116 = vmatprep.subr.mxu0 0.0
    %117 = vmatpush1.msra.mxu0 0.0
    %118 = vmatprep.subr.mxu0 0.0
    %119 = vmatpush1.msra.mxu0 0.0
    %120 = vmatprep.subr.mxu0 0.0
    %121 = vmatpush1.msra.mxu0 0.0
    %122 = vmatprep.subr.mxu0 0.0
    %123 = vmatpush1.msra.mxu0 0.0
    %124 = vmatprep.subr.mxu0 0.0
    %125 = vmatpush1.msra.mxu0 0.0
    %126 = vmatprep.mubr.f32.mxu0 0.0
    %127 = vmatmul.mubr.f32.gmra.mrb[0].mxu0 %v51
    %v128 = vpop.f32.mrb[0].mxu0
    %v129 = vadd.f32 %v47, %v128
    %v130 = vpop.f32.mrb[0].mxu0
    %131 = vmatprep.mubr.f32.mxu0 0.0
    %132 = vmatmul.mubr.f32.gmra.mrb[0].mxu0 %v54
    %v133 = vpop.f32.mrb[0].mxu0
    %v134 = vadd.f32 %v47, %v133
    %v135 = vpop.f32.mrb[0].mxu0
    %136 = vmatprep.mubr.f32.mxu0 0.0
    %137 = vmatmul.mubr.f32.gmra.mrb[0].mxu0 %v57
    %v138 = vpop.f32.mrb[0].mxu0
    %v139 = vadd.f32 %v47, %v138
    %v140 = vpop.f32.mrb[0].mxu0
    %141 = vmatprep.mubr.f32.mxu0 0.0
    %142 = vmatmul.mubr.f32.gmra.mrb[0].mxu0 %v60
    %v143 = vpop.f32.mrb[0].mxu0
    %v144 = vadd.f32 %v47, %v143
    %v145 = vpop.f32.mrb[0].mxu0
    %146 = vdwg.mxu0
    %v147 = vmax.f32 %v129, 0.0
    %v148 = vmax.f32 %v134, 0.0
    %v149 = vmax.f32 %v139, 0.0
    %v150 = vmax.f32 %v144, 0.0
    %vm151 = vcmask 261120
    %v152 = vsel %vm151, %v147, 0.0
    %v153 = vrot.slane %v152, 4
    %v154 = vadd.f32 %v152, %v153
    %v155 = vrot.slane %v154, 2
    %v156 = vadd.f32 %v154, %v155
    %v157 = vrot.slane %v156, 1
    %v158 = vadd.f32 %v156, %v157
    %v159 = vsel %vm151, %v148, 0.0
    %v160 = vrot.slane %v159, 4
    %v161 = vadd.f32 %v159, %v160
    %v162 = vrot.slane %v161, 2
    %v163 = vadd.f32 %v161, %v162
    %v164 = vrot.slane %v163, 1
    %v165 = vadd.f32 %v163, %v164
    %v166 = vsel %vm151, %v149, 0.0
    %v167 = vrot.slane %v166, 4
    %v168 = vadd.f32 %v166, %v167
    %v169 = vrot.slane %v168, 2
    %v170 = vadd.f32 %v168, %v169
    %v171 = vrot.slane %v170, 1
    %v172 = vadd.f32 %v170, %v171
    %v173 = vsel %vm151, %v150, 0.0
    %v174 = vrot.slane %v173, 4
    %v175 = vadd.f32 %v173, %v174
    %v176 = vrot.slane %v175, 2
    %v177 = vadd.f32 %v175, %v176
    %v178 = vrot.slane %v177, 1
    %v179 = vadd.f32 %v177, %v178
    %v180 = vld [vmem:[%s1] sm:$0xff]
    %v181 = vld [vmem:[%s1 + $0x8] sm:$0xff]
    %v182 = vld [vmem:[%s1 + $0x10] sm:$0xff]
    %v183 = vld [vmem:[%s1 + $0x18] sm:$0xff]
    %v184 = vld [vmem:[%s1 + $0x20] sm:$0xff]
    %v185 = vld [vmem:[%s1 + $0x28] sm:$0xff]
    %v186 = vld [vmem:[%s1 + $0x30] sm:$0xff]
    %v187 = vld [vmem:[%s1 + $0x38] sm:$0xff]
    %v188 = vld [vmem:[%s5] sm:$0xff]
    %v189 = vld [vmem:[%s6] sm:$0x1]
    %v191 = vlaneseq
    %v192 = vshrl.u32 %v191, 7
    %v193 = vsub.s32 0, %v192
    %v194 = vrot.slane %v189, %v193
    %vm196 = vcmask 64512
    %v198 = vsel %vm196, %v180, 0
    %v201 = vsel %vm196, %v181, 0
    %v204 = vsel %vm196, %v182, 0
    %v207 = vsel %vm196, %v183, 0
    %v210 = vsel %vm196, %v184, 0
    %v213 = vsel %vm196, %v185, 0
    %v216 = vsel %vm196, %v186, 0
    %v219 = vsel %vm196, %v187, 0
    %221 = vmatprep.subr.mxu0 0.0
    %222 = vmatpush1.msra.mxu0 %v188
    %223 = vmatprep.subr.mxu0 0.0
    %224 = vmatpush1.msra.mxu0 0.0
    %225 = vmatprep.subr.mxu0 0.0
    %226 = vmatpush1.msra.mxu0 0.0
    %227 = vmatprep.subr.mxu0 0.0
    %228 = vmatpush1.msra.mxu0 0.0
    %229 = vmatprep.subr.mxu0 0.0
    %230 = vmatpush1.msra.mxu0 0.0
    %231 = vmatprep.subr.mxu0 0.0
    %232 = vmatpush1.msra.mxu0 0.0
    %233 = vmatprep.subr.mxu0 0.0
    %234 = vmatpush1.msra.mxu0 0.0
    %235 = vmatprep.subr.mxu0 0.0
    %236 = vmatpush1.msra.mxu0 0.0
    %237 = vmatprep.subr.mxu0 0.0
    %238 = vmatpush1.msra.mxu0 0.0
    %239 = vmatprep.subr.mxu0 0.0
    %240 = vmatpush1.msra.mxu0 0.0
    %241 = vmatprep.subr.mxu0 0.0
    %242 = vmatpush1.msra.mxu0 0.0
    %243 = vmatprep.subr.mxu0 0.0
    %244 = vmatpush1.msra.mxu0 0.0
    %245 = vmatprep.subr.mxu0 0.0
    %246 = vmatpush1.msra.mxu0 0.0
    %247 = vmatprep.subr.mxu0 0.0
    %248 = vmatpush1.msra.mxu0 0.0
    %249 = vmatprep.subr.mxu0 0.0
    %250 = vmatpush1.msra.mxu0 0.0
    %251 = vmatprep.subr.mxu0 0.0
    %252 = vmatpush1.msra.mxu0 0.0
    %253 = vmatprep.subr.mxu0 0.0
    %254 = vmatpush1.msra.mxu0 0.0
    %255 = vmatprep.subr.mxu0 0.0
    %256 = vmatpush1.msra.mxu0 0.0
    %257 = vmatprep.subr.mxu0 0.0
    %258 = vmatpush1.msra.mxu0 0.0
    %259 = vmatprep.subr.mxu0 0.0
    %260 = vmatpush1.msra.mxu0 0.0
    %261 = vmatprep.subr.mxu0 0.0
    %262 = vmatpush1.msra.mxu0 0.0
    %263 = vmatprep.subr.mxu0 0.0
    %264 = vmatpush1.msra.mxu0 0.0
    %265 = vmatprep.subr.mxu0 0.0
    %266 = vmatpush1.msra.mxu0 0.0
    %267 = vmatprep.subr.mxu0 0.0
    %268 = vmatpush1.msra.mxu0 0.0
    %269 = vmatprep.subr.mxu0 0.0
    %270 = vmatpush1.msra.mxu0 0.0
    %271 = vmatprep.subr.mxu0 0.0
    %272 = vmatpush1.msra.mxu0 0.0
    %273 = vmatprep.subr.mxu0 0.0
    %274 = vmatpush1.msra.mxu0 0.0
    %275 = vmatprep.subr.mxu0 0.0
    %276 = vmatpush1.msra.mxu0 0.0
    %277 = vmatprep.subr.mxu0 0.0
    %278 = vmatpush1.msra.mxu0 0.0
    %279 = vmatprep.subr.mxu0 0.0
    %280 = vmatpush1.msra.mxu0 0.0
    %281 = vmatprep.subr.mxu0 0.0
    %282 = vmatpush1.msra.mxu0 0.0
    %283 = vmatprep.subr.mxu0 0.0
    %284 = vmatpush1.msra.mxu0 0.0
    %285 = vmatprep.mubr.f32.mxu0 0.0
    %286 = vmatmul.mubr.f32.gmra.mrb[0].mxu0 %v198
    %v287 = vpop.f32.mrb[0].mxu0
    %v288 = vadd.f32 %v194, %v287
    %v289 = vpop.f32.mrb[0].mxu0
    %290 = vmatprep.mubr.f32.mxu0 0.0
    %291 = vmatmul.mubr.f32.gmra.mrb[0].mxu0 %v201
    %v292 = vpop.f32.mrb[0].mxu0
    %v293 = vadd.f32 %v194, %v292
    %v294 = vpop.f32.mrb[0].mxu0
    %295 = vmatprep.mubr.f32.mxu0 0.0
    %296 = vmatmul.mubr.f32.gmra.mrb[0].mxu0 %v204
    %v297 = vpop.f32.mrb[0].mxu0
    %v298 = vadd.f32 %v194, %v297
    %v299 = vpop.f32.mrb[0].mxu0
    %300 = vmatprep.mubr.f32.mxu0 0.0
    %301 = vmatmul.mubr.f32.gmra.mrb[0].mxu0 %v207
    %v302 = vpop.f32.mrb[0].mxu0
    %v303 = vadd.f32 %v194, %v302
    %v304 = vpop.f32.mrb[0].mxu0
    %305 = vmatprep.mubr.f32.mxu0 0.0
    %306 = vmatmul.mubr.f32.gmra.mrb[0].mxu0 %v210
    %v307 = vpop.f32.mrb[0].mxu0
    %v308 = vadd.f32 %v194, %v307
    %v309 = vpop.f32.mrb[0].mxu0
    %310 = vmatprep.mubr.f32.mxu0 0.0
    %311 = vmatmul.mubr.f32.gmra.mrb[0].mxu0 %v213
    %v312 = vpop.f32.mrb[0].mxu0
    %v313 = vadd.f32 %v194, %v312
    %v314 = vpop.f32.mrb[0].mxu0
    %315 = vmatprep.mubr.f32.mxu0 0.0
    %316 = vmatmul.mubr.f32.gmra.mrb[0].mxu0 %v216
    %v317 = vpop.f32.mrb[0].mxu0
    %v318 = vadd.f32 %v194, %v317
    %v319 = vpop.f32.mrb[0].mxu0
    %320 = vmatprep.mubr.f32.mxu0 0.0
    %321 = vmatmul.mubr.f32.gmra.mrb[0].mxu0 %v219
    %v322 = vpop.f32.mrb[0].mxu0
    %v323 = vadd.f32 %v194, %v322
    %v324 = vpop.f32.mrb[0].mxu0
    %325 = vdwg.mxu0
    %v326 = vmax.f32 %v288, 0.0
    %v327 = vmax.f32 %v293, 0.0
    %v328 = vmax.f32 %v298, 0.0
    %v329 = vmax.f32 %v303, 0.0
    %v330 = vmax.f32 %v308, 0.0
    %v331 = vmax.f32 %v313, 0.0
    %v332 = vmax.f32 %v318, 0.0
    %v333 = vmax.f32 %v323, 0.0
    %v334 = vsel %vm151, %v326, 0.0
    %v335 = vsel %vm151, %v327, 0.0
    %v336 = vadd.f32 %v334, %v335
    %v337 = vrot.slane %v336, 4
    %v338 = vadd.f32 %v336, %v337
    %v339 = vrot.slane %v338, 2
    %v340 = vadd.f32 %v338, %v339
    %v341 = vrot.slane %v340, 1
    %v342 = vadd.f32 %v340, %v341
    %v343 = vsel %vm151, %v328, 0.0
    %v344 = vsel %vm151, %v329, 0.0
    %v345 = vadd.f32 %v343, %v344
    %v346 = vrot.slane %v345, 4
    %v347 = vadd.f32 %v345, %v346
    %v348 = vrot.slane %v347, 2
    %v349 = vadd.f32 %v347, %v348
    %v350 = vrot.slane %v349, 1
    %v351 = vadd.f32 %v349, %v350
    %v352 = vsel %vm151, %v330, 0.0
    %v353 = vsel %vm151, %v331, 0.0
    %v354 = vadd.f32 %v352, %v353
    %v355 = vrot.slane %v354, 4
    %v356 = vadd.f32 %v354, %v355
    %v357 = vrot.slane %v356, 2
    %v358 = vadd.f32 %v356, %v357
    %v359 = vrot.slane %v358, 1
    %v360 = vadd.f32 %v358, %v359
    %v361 = vsel %vm151, %v332, 0.0
    %v362 = vsel %vm151, %v333, 0.0
    %v363 = vadd.f32 %v361, %v362
    %v364 = vrot.slane %v363, 4
    %v365 = vadd.f32 %v363, %v364
    %v366 = vrot.slane %v365, 2
    %v367 = vadd.f32 %v365, %v366
    %v368 = vrot.slane %v367, 1
    %v369 = vadd.f32 %v367, %v368
    %v370 = vld [vmem:[%s2] sm:$0xf]
    %v371 = vld [vmem:[%s7] sm:$0xff]
    %v373 = vsel %vm196, %v370, 0
    %375 = vmatprep.subr.mxu0 0.0
    %376 = vmatpush1.msra.mxu0 %v371
    %377 = vmatprep.subr.mxu0 0.0
    %378 = vmatpush1.msra.mxu0 0.0
    %379 = vmatprep.subr.mxu0 0.0
    %380 = vmatpush1.msra.mxu0 0.0
    %381 = vmatprep.subr.mxu0 0.0
    %382 = vmatpush1.msra.mxu0 0.0
    %383 = vmatprep.subr.mxu0 0.0
    %384 = vmatpush1.msra.mxu0 0.0
    %385 = vmatprep.subr.mxu0 0.0
    %386 = vmatpush1.msra.mxu0 0.0
    %387 = vmatprep.subr.mxu0 0.0
    %388 = vmatpush1.msra.mxu0 0.0
    %389 = vmatprep.subr.mxu0 0.0
    %390 = vmatpush1.msra.mxu0 0.0
    %391 = vmatprep.subr.mxu0 0.0
    %392 = vmatpush1.msra.mxu0 0.0
    %393 = vmatprep.subr.mxu0 0.0
    %394 = vmatpush1.msra.mxu0 0.0
    %395 = vmatprep.subr.mxu0 0.0
    %396 = vmatpush1.msra.mxu0 0.0
    %397 = vmatprep.subr.mxu0 0.0
    %398 = vmatpush1.msra.mxu0 0.0
    %399 = vmatprep.subr.mxu0 0.0
    %400 = vmatpush1.msra.mxu0 0.0
    %401 = vmatprep.subr.mxu0 0.0
    %402 = vmatpush1.msra.mxu0 0.0
    %403 = vmatprep.subr.mxu0 0.0
    %404 = vmatpush1.msra.mxu0 0.0
    %405 = vmatprep.subr.mxu0 0.0
    %406 = vmatpush1.msra.mxu0 0.0
    %407 = vmatprep.subr.mxu0 0.0
    %408 = vmatpush1.msra.mxu0 0.0
    %409 = vmatprep.subr.mxu0 0.0
    %410 = vmatpush1.msra.mxu0 0.0
    %411 = vmatprep.subr.mxu0 0.0
    %412 = vmatpush1.msra.mxu0 0.0
    %413 = vmatprep.subr.mxu0 0.0
    %414 = vmatpush1.msra.mxu0 0.0
    %415 = vmatprep.subr.mxu0 0.0
    %416 = vmatpush1.msra.mxu0 0.0
    %417 = vmatprep.subr.mxu0 0.0
    %418 = vmatpush1.msra.mxu0 0.0
    %419 = vmatprep.subr.mxu0 0.0
    %420 = vmatpush1.msra.mxu0 0.0
    %421 = vmatprep.subr.mxu0 0.0
    %422 = vmatpush1.msra.mxu0 0.0
    %423 = vmatprep.subr.mxu0 0.0
    %424 = vmatpush1.msra.mxu0 0.0
    %425 = vmatprep.subr.mxu0 0.0
    %426 = vmatpush1.msra.mxu0 0.0
    %427 = vmatprep.subr.mxu0 0.0
    %428 = vmatpush1.msra.mxu0 0.0
    %429 = vmatprep.subr.mxu0 0.0
    %430 = vmatpush1.msra.mxu0 0.0
    %431 = vmatprep.subr.mxu0 0.0
    %432 = vmatpush1.msra.mxu0 0.0
    %433 = vmatprep.subr.mxu0 0.0
    %434 = vmatpush1.msra.mxu0 0.0
    %435 = vmatprep.subr.mxu0 0.0
    %436 = vmatpush1.msra.mxu0 0.0
    %437 = vmatprep.subr.mxu0 0.0
    %438 = vmatpush1.msra.mxu0 0.0
    %439 = vmatprep.mubr.f32.mxu0 0.0
    %440 = vmatmul.mubr.f32.gmra.mrb[0].mxu0 %v373
    %v441 = vpop.f32.mrb[0].mxu0
    %v442 = vadd.f32 0.0, %v441
    %v443 = vpop.f32.mrb[0].mxu0
    %444 = vdwg.mxu0
    %v445 = vmul.f32 %v158, 0.125
    %v446 = vmul.f32 %v165, 0.125
    %v447 = vmul.f32 %v172, 0.125
    %v448 = vmul.f32 %v179, 0.125
    %v449 = vmul.f32 %v342, 0.0625
    %v450 = vmul.f32 %v351, 0.0625
    %v451 = vmul.f32 %v360, 0.0625
    %v452 = vmul.f32 %v369, 0.0625
    %v453 = vadd.f32 %v445, %v449
    %v454 = vadd.f32 %v446, %v450
    %v455 = vadd.f32 %v447, %v451
    %v456 = vadd.f32 %v448, %v452
    %v458 = vrot.slane %v442, 1
    %v459 = vrot.slane %v442, 2
    %v460 = vrot.slane %v442, 3
    %v465 = vadd.f32 %v453, %v442
    %v466 = vadd.f32 %v454, %v458
    %v467 = vadd.f32 %v455, %v459
    %v468 = vadd.f32 %v456, %v460
    %v469 = vld [vmem:[%s8] sm:$0xff]
    %v470 = vld [vmem:[%s8 + $0x8] sm:$0xff]
    %v471 = vld [vmem:[%s8 + $0x10] sm:$0xff]
    %v472 = vld [vmem:[%s8 + $0x18] sm:$0xff]
    %v473 = vld [vmem:[%s9] sm:$0x1]
    %v475 = vlaneseq
    %v476 = vshrl.u32 %v475, 7
    %v477 = vsub.s32 0, %v476
    %v478 = vrot.slane %v473, %v477
    %v484 = vrot.slane %v466, 7
    %vm485 = vcmask 1041409
    %v486 = vsel %vm485, %v484, %v465
    %v487 = vrot.slane %v467, 6
    %vm488 = vcmask 1042434
    %v489 = vsel %vm488, %v487, %v486
    %v490 = vrot.slane %v468, 5
    %vm491 = vcmask 1043459
    %v492 = vsel %vm491, %v490, %v489
    %v493 = vsel %vm151, %v492, 0
    %495 = vmatprep.subr.mxu0 0.0
    %496 = vmatpush1.msra.mxu0 %v469
    %497 = vmatprep.subr.mxu0 0.0
    %498 = vmatpush1.msra.mxu0 %v470
    %499 = vmatprep.subr.mxu0 0.0
    %500 = vmatpush1.msra.mxu0 %v471
    %501 = vmatprep.subr.mxu0 0.0
    %502 = vmatpush1.msra.mxu0 %v472
    %503 = vmatprep.subr.mxu0 0.0
    %504 = vmatpush1.msra.mxu0 0.0
    %505 = vmatprep.subr.mxu0 0.0
    %506 = vmatpush1.msra.mxu0 0.0
    %507 = vmatprep.subr.mxu0 0.0
    %508 = vmatpush1.msra.mxu0 0.0
    %509 = vmatprep.subr.mxu0 0.0
    %510 = vmatpush1.msra.mxu0 0.0
    %511 = vmatprep.subr.mxu0 0.0
    %512 = vmatpush1.msra.mxu0 0.0
    %513 = vmatprep.subr.mxu0 0.0
    %514 = vmatpush1.msra.mxu0 0.0
    %515 = vmatprep.subr.mxu0 0.0
    %516 = vmatpush1.msra.mxu0 0.0
    %517 = vmatprep.subr.mxu0 0.0
    %518 = vmatpush1.msra.mxu0 0.0
    %519 = vmatprep.subr.mxu0 0.0
    %520 = vmatpush1.msra.mxu0 0.0
    %521 = vmatprep.subr.mxu0 0.0
    %522 = vmatpush1.msra.mxu0 0.0
    %523 = vmatprep.subr.mxu0 0.0
    %524 = vmatpush1.msra.mxu0 0.0
    %525 = vmatprep.subr.mxu0 0.0
    %526 = vmatpush1.msra.mxu0 0.0
    %527 = vmatprep.subr.mxu0 0.0
    %528 = vmatpush1.msra.mxu0 0.0
    %529 = vmatprep.subr.mxu0 0.0
    %530 = vmatpush1.msra.mxu0 0.0
    %531 = vmatprep.subr.mxu0 0.0
    %532 = vmatpush1.msra.mxu0 0.0
    %533 = vmatprep.subr.mxu0 0.0
    %534 = vmatpush1.msra.mxu0 0.0
    %535 = vmatprep.subr.mxu0 0.0
    %536 = vmatpush1.msra.mxu0 0.0
    %537 = vmatprep.subr.mxu0 0.0
    %538 = vmatpush1.msra.mxu0 0.0
    %539 = vmatprep.subr.mxu0 0.0
    %540 = vmatpush1.msra.mxu0 0.0
    %541 = vmatprep.subr.mxu0 0.0
    %542 = vmatpush1.msra.mxu0 0.0
    %543 = vmatprep.subr.mxu0 0.0
    %544 = vmatpush1.msra.mxu0 0.0
    %545 = vmatprep.subr.mxu0 0.0
    %546 = vmatpush1.msra.mxu0 0.0
    %547 = vmatprep.subr.mxu0 0.0
    %548 = vmatpush1.msra.mxu0 0.0
    %549 = vmatprep.subr.mxu0 0.0
    %550 = vmatpush1.msra.mxu0 0.0
    %551 = vmatprep.subr.mxu0 0.0
    %552 = vmatpush1.msra.mxu0 0.0
    %553 = vmatprep.subr.mxu0 0.0
    %554 = vmatpush1.msra.mxu0 0.0
    %555 = vmatprep.subr.mxu0 0.0
    %556 = vmatpush1.msra.mxu0 0.0
    %557 = vmatprep.subr.mxu0 0.0
    %558 = vmatpush1.msra.mxu0 0.0
    %559 = vmatprep.mubr.f32.mxu0 0.0
    %560 = vmatmul.mubr.f32.gmra.mrb[0].mxu0 %v493
    %v561 = vpop.f32.mrb[0].mxu0
    %v562 = vadd.f32 %v478, %v561
    %v563 = vpop.f32.mrb[0].mxu0
    %564 = vdwg.mxu0
    %vm565 = vcmask 60416
    %566 = vst.msk [vmem:[#allocation2] sm:$0xf] %vm565, %v562
    // Predicated region
    $region42: #{tpu_custom_call.1} parent=1 // pred_check
      _
    $region43: #{tpu_custom_call.1} parent=1 // pred_check_branch
      %568 = sbr.rel (0) target = $region45
    $region44: #{tpu_custom_call.1} parent=1 // pred_region
      %s570 = ssub.s32 64, 64
      %571 = vsyncadd [#allocation3], %s570
      %s573 = sshll.u32 [#allocation2], 4
      %s574 = int_to_ptr.vmem [resolvable:$true] %s573
      %576 = dma.vmem_to_hbm [thread:$0]  %s574, 64, %s10, [#allocation3]
    $region45: #{tpu_custom_call.1} parent=1 // pred_fallthru
      _
    // Predicated region
    $region46: #{tpu_custom_call.1} parent=1 // pred_check
      _
    $region47: #{tpu_custom_call.1} parent=1 // pred_check_branch
      %578 = sbr.rel (0) target = $region49
    $region48: #{tpu_custom_call.1} parent=1 // pred_region
      %579 = dma.done [#allocation3], 64
    $region49: #{tpu_custom_call.1} parent=1 // pred_fallthru
      _
    %580 = vsyncpa [#allocation3], 1

</llo_original>
